<compile_context>
chip_gen: v7x
topology: tpu7x:2x2x1
jax: 0.10.0
libtpu: 0.0.40
codegen_flags: <defaults>
</compile_context>

<pallas_src>
import jax
import jax.numpy as jnp
from jax.experimental import pallas as pl
from jax.experimental.pallas import tpu as pltpu


def _attention_kernel(x_ref, w1_ref, b1_ref, w2r_ref, ws_ref, aw_ref):
    # x_ref : (TB, S, D)   w1_ref : (D, A)   b1_ref : (1, A)   w2r_ref : (1, A)
    # ws_ref: (TB, D)      aw_ref : (TB, S)
    TB, S, D = x_ref.shape

    x = x_ref[...]                                       # (TB, S, D)
    x2 = x.reshape(TB * S, D)                            # batch*seq -> MXU M dim

    # Linear1 + ReLU: one big MXU matmul, f32 accumulation.
    h = jnp.dot(x2, w1_ref[...], preferred_element_type=jnp.float32)
    h = jnp.maximum(h + b1_ref[...], 0.0)                # (TB*S, A)

    # Linear2 (output width 1) on the VPU/XLU instead of an N=1 MXU matmul,
    # laid out lane-dense as (TB, S).  b2 is omitted on purpose: softmax over
    # the sequence axis is shift-invariant, so b2 has no effect on any output.
    s = jnp.sum(h.reshape(TB, S, -1) * w2r_ref[...], axis=-1)   # (TB, S)

    # Softmax over the sequence axis (lane axis here -> cheap lane reductions).
    m = jnp.max(s, axis=-1, keepdims=True)               # (TB, 1)
    p = jnp.exp(s - m)                                   # (TB, S)
    denom = jnp.sum(p, axis=-1, keepdims=True)           # (TB, 1)
    w = p * pl.reciprocal(denom, approx=True)            # (TB, S)  (EUP vrcp)

    aw_ref[...] = w.astype(aw_ref.dtype)                 # lane-dense store

    # Weighted sum over the sequence axis -> (TB, D).
    ws = jnp.sum(x.astype(jnp.float32) * w[:, :, None], axis=1)
    ws_ref[...] = ws.astype(ws_ref.dtype)


def _pick_batch_block(B, S, D, itemsize=4, x_block_budget_bytes=8 << 20):
    """Largest divisor of B whose x block fits the budget (v7x-safe with
    double-buffering under a 32 MiB scoped limit); only split into >=2 grid
    steps (v7x has 2 TensorCores) when each block still has TB*S >= 256 rows."""
    divisors = [t for t in range(1, B + 1) if B % t == 0]
    fits = [t for t in divisors if t * S * D * itemsize <= x_block_budget_bytes] or [1]
    tb = max(fits)
    split = [t for t in fits if (B // t) >= 2 and t * S >= 256]
    if split:
        tb = max(split)
    return tb


def attention_forward(x, w1, b1, w2, b2=None):
    """x: [B, S, D].  w1: [D, A], b1: [A], w2: [A, 1], b2: unused (softmax over
    the sequence axis is shift-invariant, so b2 cannot change the outputs).

    Returns (weighted_sum [B, D], attention_weights [B, S, 1]) — same shapes as
    the PyTorch module."""
    B, S, D = x.shape
    A = w1.shape[1]
    del b2  # mathematically inert for this module's outputs

    b1_row = b1.reshape(1, A)
    w2_row = w2.reshape(1, A)   # row layout: kernel contracts W2 on the lane axis

    TB = _pick_batch_block(B, S, D, jnp.dtype(x.dtype).itemsize)
    grid = (B // TB,)

    out_shapes = (
        jax.ShapeDtypeStruct((B, D), x.dtype),   # weighted_sum
        jax.ShapeDtypeStruct((B, S), x.dtype),   # attention_weights (lane-dense)
    )

    grid_spec = pltpu.PrefetchScalarGridSpec(
        num_scalar_prefetch=0,
        grid=grid,
        in_specs=[
            pl.BlockSpec((TB, S, D), lambda b: (b, 0, 0)),   # x: TB batch rows / step
            pl.BlockSpec((D, A), lambda b: (0, 0)),          # W1 (resident)
            pl.BlockSpec((1, A), lambda b: (0, 0)),          # b1
            pl.BlockSpec((1, A), lambda b: (0, 0)),          # W2 as a row
        ],
        out_specs=[
            pl.BlockSpec((TB, D), lambda b: (b, 0)),
            pl.BlockSpec((TB, S), lambda b: (b, 0)),
        ],
    )

    ws, aw = pl.pallas_call(
        _attention_kernel,
        out_shape=out_shapes,
        grid_spec=grid_spec,
        compiler_params=pltpu.CompilerParams(
            dimension_semantics=("parallel",),
            vmem_limit_bytes=32 << 20,   # safe on v5e/v6e (128 MiB) and v7x (64 MiB)
        ),
    )(x, w1, b1_row, w2_row)

    # TODO(synk): for very large S, tile over S in-kernel with an online-softmax
    # accumulator so the (TB, S, D) slab need not be fully VMEM-resident.
    return ws, aw.reshape(B, S, 1)


def _reference(x, w1, b1, w2, b2):
    h = jnp.maximum(x @ w1 + b1, 0.0)
    s = h @ w2 + b2                                  # (B, S, 1)
    w = jax.nn.softmax(s, axis=1)
    ws = jnp.sum(x * w, axis=1)
    return ws, w


if __name__ == "__main__":
    B, S, D, A = 2, 8, 32, 16   # batch, seq, input_dim, attention_dim

    key = jax.random.PRNGKey(0)
    kx, k1, kb1, k2, kb2 = jax.random.split(key, 5)
    x = jax.random.normal(kx, (B, S, D), dtype=jnp.float32)
    # nn.Linear(D, A) / nn.Linear(A, 1) weights, stored transposed for `x @ W`.
    w1 = jax.random.normal(k1, (D, A), dtype=jnp.float32) * (1.0 / jnp.sqrt(D))
    b1 = jax.random.normal(kb1, (A,), dtype=jnp.float32) * 0.01
    w2 = jax.random.normal(k2, (A, 1), dtype=jnp.float32) * (1.0 / jnp.sqrt(A))
    b2 = jax.random.normal(kb2, (1,), dtype=jnp.float32) * 0.01

    ws, aw = attention_forward(x, w1, b1, w2, b2)
    jax.block_until_ready((ws, aw))

    ws_ref, aw_ref = _reference(x, w1, b1, w2, b2)
    assert ws.shape == (B, D) and aw.shape == (B, S, 1)
    # approx=True reciprocal (EUP vrcp) trades a few ULPs; 1e-3 is ample here.
    assert jnp.allclose(ws, ws_ref, atol=1e-3, rtol=1e-3)
    assert jnp.allclose(aw, aw_ref, atol=1e-3, rtol=1e-3)

    print("KERNEL_OK")
</pallas_src>

<mosaic_0001>
module attributes {stable_mosaic.version = 11 : i64} {
  func.func @_attention_kernel(%arg0: i32, %arg1: memref<2x8x32xf32, #tpu.memory_space<vmem>>, %arg2: memref<32x16xf32, #tpu.memory_space<vmem>>, %arg3: memref<1x16xf32, #tpu.memory_space<vmem>>, %arg4: memref<1x16xf32, #tpu.memory_space<vmem>>, %arg5: memref<2x32xf32, #tpu.memory_space<vmem>>, %arg6: memref<2x8xf32, #tpu.memory_space<vmem>>) attributes {dimension_semantics = [#tpu.dimension_semantics<parallel>], iteration_bounds = array<i64: 1>, scalar_prefetch = 0 : i64, scratch_operands = 0 : i64, tpu.core_type = #tpu.core_type<tc>, window_params = [{transform_indices = @transform_0, window_bounds = array<i64: 2, 8, 32>}, {pipeline_mode = #tpu.pipeline_mode<synchronous>, transform_indices = @transform_1, window_bounds = array<i64: 32, 16>}, {pipeline_mode = #tpu.pipeline_mode<synchronous>, transform_indices = @transform_2, window_bounds = array<i64: 1, 16>}, {pipeline_mode = #tpu.pipeline_mode<synchronous>, transform_indices = @transform_3, window_bounds = array<i64: 1, 16>}, {transform_indices = @transform_4, window_bounds = array<i64: 2, 32>}, {transform_indices = @transform_5, window_bounds = array<i64: 2, 8>}]} {
    %c0 = arith.constant 0 : index
    %c0_0 = arith.constant 0 : index
    %c0_1 = arith.constant 0 : index
    %0 = vector.load %arg1[%c0, %c0_0, %c0_1] : memref<2x8x32xf32, #tpu.memory_space<vmem>>, vector<2x8x32xf32>
    %1 = vector.shape_cast %0 : vector<2x8x32xf32> to vector<16x32xf32>
    %c0_2 = arith.constant 0 : index
    %c0_3 = arith.constant 0 : index
    %2 = vector.load %arg2[%c0_2, %c0_3] : memref<32x16xf32, #tpu.memory_space<vmem>>, vector<32x16xf32>
    %cst = arith.constant dense<0.000000e+00> : vector<16x16xf32>
    %3 = tpu.matmul %1, %2, %cst {dimension_numbers = #tpu.dot_dimension_numbers<[1], [0], [0], [1], [0, 0, 1, 1], [], []>} : vector<16x32xf32>, vector<32x16xf32>, vector<16x16xf32> -> vector<16x16xf32>
    %c0_4 = arith.constant 0 : index
    %c0_5 = arith.constant 0 : index
    %4 = vector.load %arg3[%c0_4, %c0_5] : memref<1x16xf32, #tpu.memory_space<vmem>>, vector<1x16xf32>
    %5 = vector.broadcast %4 : vector<1x16xf32> to vector<16x16xf32>
    %6 = arith.addf %3, %5 : vector<16x16xf32>
    %cst_6 = arith.constant 0.000000e+00 : f32
    %7 = vector.broadcast %cst_6 : f32 to vector<16x16xf32>
    %8 = arith.maximumf %6, %7 : vector<16x16xf32>
    %9 = vector.shape_cast %8 : vector<16x16xf32> to vector<2x8x16xf32>
    %c0_7 = arith.constant 0 : index
    %c0_8 = arith.constant 0 : index
    %10 = vector.load %arg4[%c0_7, %c0_8] : memref<1x16xf32, #tpu.memory_space<vmem>>, vector<1x16xf32>
    %11 = vector.shape_cast %10 : vector<1x16xf32> to vector<1x1x16xf32>
    %12 = vector.broadcast %11 : vector<1x1x16xf32> to vector<2x8x16xf32>
    %13 = arith.mulf %9, %12 : vector<2x8x16xf32>
    %cst_9 = arith.constant dense<0.000000e+00> : vector<2x8xf32>
    %14 = vector.multi_reduction <add>, %13, %cst_9 [2] : vector<2x8x16xf32> to vector<2x8xf32>
    %cst_10 = arith.constant dense<0xFF800000> : vector<2xf32>
    %15 = vector.multi_reduction <maximumf>, %14, %cst_10 [1] : vector<2x8xf32> to vector<2xf32>
    %16 = vector.shape_cast %15 : vector<2xf32> to vector<2x1xf32>
    %17 = vector.broadcast %16 : vector<2x1xf32> to vector<2x8xf32>
    %18 = arith.subf %14, %17 : vector<2x8xf32>
    %19 = math.exp %18 : vector<2x8xf32>
    %cst_11 = arith.constant dense<0.000000e+00> : vector<2xf32>
    %20 = vector.multi_reduction <add>, %19, %cst_11 [1] : vector<2x8xf32> to vector<2xf32>
    %21 = vector.shape_cast %20 : vector<2xf32> to vector<2x1xf32>
    %22 = tpu.reciprocal %21 {approx = true} : vector<2x1xf32> -> vector<2x1xf32>
    %23 = vector.broadcast %22 : vector<2x1xf32> to vector<2x8xf32>
    %24 = arith.mulf %19, %23 : vector<2x8xf32>
    %c0_12 = arith.constant 0 : index
    %c0_13 = arith.constant 0 : index
    %25 = vector.load %arg6[%c0_12, %c0_13] : memref<2x8xf32, #tpu.memory_space<vmem>>, vector<2x8xf32>
    tpu.vector_store %arg6[%c0_12, %c0_13], %24 {strides = array<i32>} : memref<2x8xf32, #tpu.memory_space<vmem>>, vector<2x8xf32>,
    %26 = vector.shape_cast %24 : vector<2x8xf32> to vector<2x8x1xf32>
    %27 = vector.broadcast %26 : vector<2x8x1xf32> to vector<2x8x32xf32>
    %28 = arith.mulf %0, %27 : vector<2x8x32xf32>
    %cst_14 = arith.constant dense<0.000000e+00> : vector<2x32xf32>
    %29 = vector.multi_reduction <add>, %28, %cst_14 [1] : vector<2x8x32xf32> to vector<2x32xf32>
    %c0_15 = arith.constant 0 : index
    %c0_16 = arith.constant 0 : index
    %30 = vector.load %arg5[%c0_15, %c0_16] : memref<2x32xf32, #tpu.memory_space<vmem>>, vector<2x32xf32>
    tpu.vector_store %arg5[%c0_15, %c0_16], %29 {strides = array<i32>} : memref<2x32xf32, #tpu.memory_space<vmem>>, vector<2x32xf32>,
    return
  }
  func.func @transform_0(%arg0: i32) -> (i32, i32, i32) {
    %c0_i32 = arith.constant 0 : i32
    %c0_i32_0 = arith.constant 0 : i32
    %c0_i32_1 = arith.constant 0 : i32
    return %arg0, %c0_i32, %c0_i32_0 : i32, i32, i32
  }
  func.func @transform_1(%arg0: i32) -> (i32, i32) {
    %c0_i32 = arith.constant 0 : i32
    %c0_i32_0 = arith.constant 0 : i32
    %c0_i32_1 = arith.constant 0 : i32
    return %c0_i32, %c0_i32_0 : i32, i32
  }
  func.func @transform_2(%arg0: i32) -> (i32, i32) {
    %c0_i32 = arith.constant 0 : i32
    %c0_i32_0 = arith.constant 0 : i32
    %c0_i32_1 = arith.constant 0 : i32
    return %c0_i32, %c0_i32_0 : i32, i32
  }
  func.func @transform_3(%arg0: i32) -> (i32, i32) {
    %c0_i32 = arith.constant 0 : i32
    %c0_i32_0 = arith.constant 0 : i32
    %c0_i32_1 = arith.constant 0 : i32
    return %c0_i32, %c0_i32_0 : i32, i32
  }
  func.func @transform_4(%arg0: i32) -> (i32, i32) {
    %c0_i32 = arith.constant 0 : i32
    %c0_i32_0 = arith.constant 0 : i32
    return %arg0, %c0_i32 : i32, i32
  }
  func.func @transform_5(%arg0: i32) -> (i32, i32) {
    %c0_i32 = arith.constant 0 : i32
    %c0_i32_0 = arith.constant 0 : i32
    return %arg0, %c0_i32 : i32, i32
  }
}

</mosaic_0001>

<llo_original>
// kernel: tpu_custom_call.1
$region0: #{tpu_custom_call.1}
  #allocation0 [shape = 'u32[]', space=smem, size = 0x4, offset = 0x4, fixed_abs, tag = 'smem constant byte address 0x4 - core index']
  #allocation1 [shape = 'u32[144,128]{1,0:T(1,128)}', space=vmem, size = 0x12000, scoped, tag = 'internal scratch']
  %s0 = inlined_call_operand.vmem [shape: f32[2,8,32], index: 0, kind: input, shape index: {}]
  %s1 = inlined_call_operand.vmem [shape: f32[32,16], index: 1, kind: input, shape index: {}]
  %s2 = inlined_call_operand.vmem [shape: f32[1,16], index: 2, kind: input, shape index: {}]
  %s3 = inlined_call_operand.vmem [shape: f32[1,16], index: 3, kind: input, shape index: {}]
  %s4 = inlined_call_operand.hbm [shape: f32[2,32], index: 4, kind: output, shape index: {0}]
  %s5 = inlined_call_operand.hbm [shape: f32[2,8], index: 5, kind: output, shape index: {1}]
  %6 = xla_tuple %s4, %s5
  %s7 = sld [smem:[#allocation0]]
  $region34: #{tpu_custom_call.1} parent=0
    _
  %s9 = ssub.s32 1, %s7
  %s10 = scalar_select 0, %s9, %s7
  $region1: #{tpu_custom_call.1} parent=0
    #allocation2 [shape = 'u8[1024]{0}', space=vmem, size = 0x400, scoped, tag = 'output window, operand 0, single buffered']
    #allocation3 [shape = 's32[1]{0}', space=sflag, size = 0x4, scoped, tag = 'scoped memory for tpu_custom_call.1']
    #allocation4 [shape = 'u8[1024]{0}', space=vmem, size = 0x400, scoped, tag = 'output window, operand 1, single buffered']
    #allocation5 [shape = 's32[1]{0}', space=sflag, size = 0x4, scoped, tag = 'scoped memory for tpu_custom_call.1']
    %11 = vsyncpa [#allocation3], 0
    %12 = vsyncpa [#allocation5], 0
    // Predicated region
    $region2: #{tpu_custom_call.1} parent=1 // pred_check
      _
    $region3: #{tpu_custom_call.1} parent=1 // pred_check_branch
      %14 = sbr.rel (0) target = $region5
    $region4: #{tpu_custom_call.1} parent=1 // pred_region
      _
    $region5: #{tpu_custom_call.1} parent=1 // pred_fallthru
      _
    // Predicated region
    $region6: #{tpu_custom_call.1} parent=1 // pred_check
      _
    $region7: #{tpu_custom_call.1} parent=1 // pred_check_branch
      %16 = sbr.rel (0) target = $region9
    $region8: #{tpu_custom_call.1} parent=1 // pred_region
      _
    $region9: #{tpu_custom_call.1} parent=1 // pred_fallthru
      _
    // Predicated region
    $region10: #{tpu_custom_call.1} parent=1 // pred_check
      _
    $region11: #{tpu_custom_call.1} parent=1 // pred_check_branch
      %18 = sbr.rel (0) target = $region13
    $region12: #{tpu_custom_call.1} parent=1 // pred_region
      _
    $region13: #{tpu_custom_call.1} parent=1 // pred_fallthru
      _
    // Predicated region
    $region14: #{tpu_custom_call.1} parent=1 // pred_check
      _
    $region15: #{tpu_custom_call.1} parent=1 // pred_check_branch
      %20 = sbr.rel (0) target = $region17
    $region16: #{tpu_custom_call.1} parent=1 // pred_region
      _
    $region17: #{tpu_custom_call.1} parent=1 // pred_fallthru
      _
    %v21 = vld [vmem:[%s0] sm:$0xff]
    %v22 = vld [vmem:[%s0 + $0x8] sm:$0xff]
    %v23 = vld [vmem:[%s1] sm:$0xff]
    %v24 = vld [vmem:[%s1 + $0x8] sm:$0xff]
    %v25 = vld [vmem:[%s1 + $0x10] sm:$0xff]
    %v26 = vld [vmem:[%s1 + $0x18] sm:$0xff]
    %v27 = vld [vmem:[%s2] sm:$0x1]
    %v29 = vlaneseq
    %v30 = vshrl.u32 %v29, 7
    %v31 = vsub.s32 0, %v30
    %v32 = vrot.slane %v27, %v31
    %vm34 = vcmask 261120
    %v36 = vsel %vm34, %v21, 0
    %v39 = vsel %vm34, %v22, 0
    %41 = vmatprep.subr.mxu0 0.0
    %42 = vmatpush1.msra.mxu0 %v23
    %43 = vmatprep.subr.mxu0 0.0
    %44 = vmatpush1.msra.mxu0 %v24
    %45 = vmatprep.subr.mxu0 0.0
    %46 = vmatpush1.msra.mxu0 %v25
    %47 = vmatprep.subr.mxu0 0.0
    %48 = vmatpush1.msra.mxu0 %v26
    %49 = vmatprep.subr.mxu0 0.0
    %50 = vmatpush1.msra.mxu0 0.0
    %51 = vmatprep.subr.mxu0 0.0
    %52 = vmatpush1.msra.mxu0 0.0
    %53 = vmatprep.subr.mxu0 0.0
    %54 = vmatpush1.msra.mxu0 0.0
    %55 = vmatprep.subr.mxu0 0.0
    %56 = vmatpush1.msra.mxu0 0.0
    %57 = vmatprep.subr.mxu0 0.0
    %58 = vmatpush1.msra.mxu0 0.0
    %59 = vmatprep.subr.mxu0 0.0
    %60 = vmatpush1.msra.mxu0 0.0
    %61 = vmatprep.subr.mxu0 0.0
    %62 = vmatpush1.msra.mxu0 0.0
    %63 = vmatprep.subr.mxu0 0.0
    %64 = vmatpush1.msra.mxu0 0.0
    %65 = vmatprep.subr.mxu0 0.0
    %66 = vmatpush1.msra.mxu0 0.0
    %67 = vmatprep.subr.mxu0 0.0
    %68 = vmatpush1.msra.mxu0 0.0
    %69 = vmatprep.subr.mxu0 0.0
    %70 = vmatpush1.msra.mxu0 0.0
    %71 = vmatprep.subr.mxu0 0.0
    %72 = vmatpush1.msra.mxu0 0.0
    %73 = vmatprep.subr.mxu0 0.0
    %74 = vmatpush1.msra.mxu0 0.0
    %75 = vmatprep.subr.mxu0 0.0
    %76 = vmatpush1.msra.mxu0 0.0
    %77 = vmatprep.subr.mxu0 0.0
    %78 = vmatpush1.msra.mxu0 0.0
    %79 = vmatprep.subr.mxu0 0.0
    %80 = vmatpush1.msra.mxu0 0.0
    %81 = vmatprep.subr.mxu0 0.0
    %82 = vmatpush1.msra.mxu0 0.0
    %83 = vmatprep.subr.mxu0 0.0
    %84 = vmatpush1.msra.mxu0 0.0
    %85 = vmatprep.subr.mxu0 0.0
    %86 = vmatpush1.msra.mxu0 0.0
    %87 = vmatprep.subr.mxu0 0.0
    %88 = vmatpush1.msra.mxu0 0.0
    %89 = vmatprep.subr.mxu0 0.0
    %90 = vmatpush1.msra.mxu0 0.0
    %91 = vmatprep.subr.mxu0 0.0
    %92 = vmatpush1.msra.mxu0 0.0
    %93 = vmatprep.subr.mxu0 0.0
    %94 = vmatpush1.msra.mxu0 0.0
    %95 = vmatprep.subr.mxu0 0.0
    %96 = vmatpush1.msra.mxu0 0.0
    %97 = vmatprep.subr.mxu0 0.0
    %98 = vmatpush1.msra.mxu0 0.0
    %99 = vmatprep.subr.mxu0 0.0
    %100 = vmatpush1.msra.mxu0 0.0
    %101 = vmatprep.subr.mxu0 0.0
    %102 = vmatpush1.msra.mxu0 0.0
    %103 = vmatprep.subr.mxu0 0.0
    %104 = vmatpush1.msra.mxu0 0.0
    %105 = vmatprep.mubr.f32.mxu0 0.0
    %106 = vmatmul.mubr.f32.gmra.mrb[0].mxu0 %v36
    %v107 = vpop.f32.mrb[0].mxu0
    %v108 = vadd.f32 %v32, %v107
    %v109 = vpop.f32.mrb[0].mxu0
    %110 = vmatprep.mubr.f32.mxu0 0.0
    %111 = vmatmul.mubr.f32.gmra.mrb[0].mxu0 %v39
    %v112 = vpop.f32.mrb[0].mxu0
    %v113 = vadd.f32 %v32, %v112
    %v114 = vpop.f32.mrb[0].mxu0
    %115 = vdwg.mxu0
    %v116 = vmax.f32 %v108, 0.0
    %v117 = vmax.f32 %v113, 0.0
    %v118 = vld [vmem:[%s3] sm:$0x1]
    %v120 = vlaneseq
    %v121 = vshrl.u32 %v120, 7
    %v122 = vsub.s32 0, %v121
    %v123 = vrot.slane %v118, %v122
    %v125 = vmul.f32 %v116, %v123
    %v126 = vmul.f32 %v117, %v123
    %vm127 = vcmask 130048
    %v128 = vsel %vm127, %v125, 0.0
    %129 = vadd.xlane.f32.xlu0 %v128
    %v130 = vpop.xlane.xlu0 %129
    %v131 = vsel %vm127, %v126, 0.0
    %132 = vadd.xlane.f32.xlu0 %v131
    %v133 = vpop.xlane.xlu0 %132
    %v136 = vlaneseq
    %v137 = vand.u32 %v136, 127
    %v138 = vlaneseq
    %v139 = vshrl.u32 %v138, 7
    %v140 = vsub.s32 %v137, %v139
    %v141 = vrot.slane %v130, %v140
    %v142 = vlaneseq
    %v143 = vshrl.u32 %v142, 7
    %v144 = vsub.s32 %v137, %v143
    %v145 = vrot.slane %v133, %v144
    %vm146 = vcmask 1041409
    %v147 = vsel %vm146, %v145, %v141
    %vm149 = vcmask 58368
    %v150 = vsel %vm149, %v147, -inf
    %151 = vmax.xlane.f32.xlu0 %v150
    %v152 = vpop.xlane.xlu0 %151
    %v154 = vlaneseq
    %v155 = vshrl.u32 %v154, 7
    %v156 = vsub.s32 0, %v155
    %v157 = vrot.slane %v152, %v156
    %v158 = vlaneseq
    %v159 = vshrl.u32 %v158, 7
    %v160 = vsub.s32 1, %v159
    %v161 = vrot.slane %v152, %v160
    %v164 = vsub.f32 %v130, %v157
    %v165 = vsub.f32 %v133, %v161
    %v166 = vmul.f32 %v164, 1.442695
    %v167 = vpow.pop %v166
    %v168 = vmul.f32 %v165, 1.442695
    %v169 = vpow.pop %v168
    %172 = vset.pattern.permute.xlu0 0
    %173 = vperm.xlu0 %172, %v167
    %v174 = vpop.permute.xlu0 %173
    %175 = vset.pattern.permute.xlu0 0
    %176 = vperm.xlu0 %175, %v169
    %v177 = vpop.permute.xlu0 %176
    %v178 = vlaneseq
    %v179 = vshrl.u32 %v178, 7
    %v180 = vsub.s32 %v137, %v179
    %v181 = vrot.slane %v174, %v180
    %v182 = vlaneseq
    %v183 = vshrl.u32 %v182, 7
    %v184 = vsub.s32 %v137, %v183
    %v185 = vrot.slane %v177, %v184
    %v186 = vsel %vm146, %v185, %v181
    %v188 = vsel %vm149, %v186, 0.0
    %189 = vadd.xlane.f32.xlu0 %v188
    %v190 = vpop.xlane.xlu0 %189
    %v191 = vrcp.pop %v190
    %v193 = vlaneseq
    %v194 = vshrl.u32 %v193, 7
    %v195 = vsub.s32 0, %v194
    %v196 = vrot.slane %v191, %v195
    %v197 = vlaneseq
    %v198 = vshrl.u32 %v197, 7
    %v199 = vsub.s32 1, %v198
    %v200 = vrot.slane %v191, %v199
    %v203 = vmul.f32 %v167, %v196
    %v204 = vmul.f32 %v169, %v200
    %207 = vset.pattern.permute.xlu0 0
    %208 = vperm.xlu0 %207, %v203
    %v209 = vpop.permute.xlu0 %208
    %210 = vset.pattern.permute.xlu0 0
    %211 = vperm.xlu0 %210, %v204
    %v212 = vpop.permute.xlu0 %211
    %v213 = vlaneseq
    %v214 = vshrl.u32 %v213, 7
    %v215 = vsub.s32 %v137, %v214
    %v216 = vrot.slane %v209, %v215
    %v217 = vlaneseq
    %v218 = vshrl.u32 %v217, 7
    %v219 = vsub.s32 %v137, %v218
    %v220 = vrot.slane %v212, %v219
    %v221 = vsel %vm146, %v220, %v216
    %223 = vst.msk [vmem:[#allocation4] sm:$0x3] %vm149, %v221
    %v226 = vmul.f32 %v21, %v209
    %v227 = vmul.f32 %v22, %v212
    %v228 = vsel %vm34, %v226, 0.0
    %v229 = vrot.slane %v228, 4
    %v230 = vadd.f32 %v228, %v229
    %v231 = vrot.slane %v230, 2
    %v232 = vadd.f32 %v230, %v231
    %v233 = vrot.slane %v232, 1
    %v234 = vadd.f32 %v232, %v233
    %v235 = vsel %vm34, %v227, 0.0
    %v236 = vrot.slane %v235, 4
    %v237 = vadd.f32 %v235, %v236
    %v238 = vrot.slane %v237, 2
    %v239 = vadd.f32 %v237, %v238
    %v240 = vrot.slane %v239, 1
    %v241 = vadd.f32 %v239, %v240
    %v244 = vsel %vm146, %v241, %v234
    %vm246 = vcmask 254976
    %247 = vst.msk [vmem:[#allocation2] sm:$0x3] %vm246, %v244
    // Predicated region
    $region18: #{tpu_custom_call.1} parent=1 // pred_check
      _
    $region19: #{tpu_custom_call.1} parent=1 // pred_check_branch
      %249 = sbr.rel (0) target = $region21
    $region20: #{tpu_custom_call.1} parent=1 // pred_region
      %s251 = ssub.s32 32, 32
      %252 = vsyncadd [#allocation3], %s251
      %s254 = sshll.u32 [#allocation2], 4
      %s255 = int_to_ptr.vmem [resolvable:$true] %s254
      %257 = dma.vmem_to_hbm [thread:$0]  %s255, 32, %s4, [#allocation3]
    $region21: #{tpu_custom_call.1} parent=1 // pred_fallthru
      _
    // Predicated region
    $region22: #{tpu_custom_call.1} parent=1 // pred_check
      _
    $region23: #{tpu_custom_call.1} parent=1 // pred_check_branch
      %259 = sbr.rel (0) target = $region25
    $region24: #{tpu_custom_call.1} parent=1 // pred_region
      %s261 = ssub.s32 32, 32
      %262 = vsyncadd [#allocation5], %s261
      %s264 = sshll.u32 [#allocation4], 4
      %s265 = int_to_ptr.vmem [resolvable:$true] %s264
      %267 = dma.vmem_to_hbm [thread:$0]  %s265, 32, %s5, [#allocation5]
    $region25: #{tpu_custom_call.1} parent=1 // pred_fallthru
      _
    // Predicated region
    $region26: #{tpu_custom_call.1} parent=1 // pred_check
      _
    $region27: #{tpu_custom_call.1} parent=1 // pred_check_branch
      %269 = sbr.rel (0) target = $region29
    $region28: #{tpu_custom_call.1} parent=1 // pred_region
      %270 = dma.done [#allocation3], 32
    $region29: #{tpu_custom_call.1} parent=1 // pred_fallthru
      _
    // Predicated region
    $region30: #{tpu_custom_call.1} parent=1 // pred_check
      _
    $region31: #{tpu_custom_call.1} parent=1 // pred_check_branch
      %272 = sbr.rel (0) target = $region33
    $region32: #{tpu_custom_call.1} parent=1 // pred_region
      %273 = dma.done [#allocation5], 32
    $region33: #{tpu_custom_call.1} parent=1 // pred_fallthru
      _
    %274 = vsyncpa [#allocation3], 1
    %275 = vsyncpa [#allocation5], 1

</llo_original>
